<compile_context>
chip_gen: v7x
topology: tpu7x:2x2x1
jax: 0.10.0
libtpu: 0.0.40
codegen_flags: <defaults>
</compile_context>

<pallas_src>
import functools

import jax
import jax.numpy as jnp
import numpy as np
from jax.experimental import pallas as pl
from jax.experimental.pallas import tpu as pltpu


def _round_up(x: int, m: int) -> int:
    return (x + m - 1) // m * m


def _cdiv(a: int, b: int) -> int:
    return (a + b - 1) // b


def _pad2d(a, rows, cols):
    pr, pc = rows - a.shape[0], cols - a.shape[1]
    if pr or pc:
        a = jnp.pad(a, ((0, pr), (0, pc)))
    return a


@functools.lru_cache(maxsize=None)
def _hw_config():
    """Returns (vmem_capacity_bytes, is_v6, has_256_mxu); conservative fallbacks."""
    try:
        vmem = int(pltpu.get_tpu_info().vmem_capacity_bytes)
    except Exception:
        vmem = 64 << 20                       # v7x-sized fallback: safe everywhere
    kind = ""
    try:
        kind = jax.devices()[0].device_kind.lower()
    except Exception:
        pass
    is_v6 = "v6" in kind
    mxu256 = is_v6 or "v7" in kind or "7x" in kind
    return vmem, is_v6, mxu256


def _embed_pad(E: int, mxu256: bool) -> int:
    e_pad = _round_up(max(E, 128), 128)
    # Prefer 256-aligned lanes on v6e/v7x when the extra padding is small.
    if mxu256 and e_pad >= 1024 and e_pad % 256:
        e_pad = _round_up(e_pad, 256)
    return e_pad


def _hidden_pad(H: int) -> int:
    h_pad = _round_up(max(H, 128), 128)
    if h_pad > 512 and h_pad % 256:
        h_pad = _round_up(h_pad, 256)
    return h_pad


def _block_h_for(h_pad: int) -> int:
    # Single tile for small H; otherwise 512 (preferred) or 256 -- never 128,
    # so the strided W1 column-sliver DMA keeps >= 512B per-row segments.
    if h_pad <= 512:
        return h_pad
    return 512 if h_pad % 512 == 0 else 256


def _ffn_kernel(x_ref, w1_ref, b1_ref, w2_ref, b2_ref, o_ref, acc_ref):
    # Grid = (row tiles, hidden tiles); hidden (axis 1) is the reduction axis.
    hk = pl.program_id(1)

    @pl.when(hk == 0)
    def _():
        acc_ref[...] = jnp.zeros_like(acc_ref)

    # (tm, E) @ (E, th) on the MXU; bias add + ReLU in f32.
    h = jnp.dot(x_ref[...], w1_ref[...], preferred_element_type=jnp.float32)
    h = jnp.maximum(h + b1_ref[...], 0.0)

    # (tm, th) @ (th, E) accumulated into the resident f32 VMEM scratch.
    acc_ref[...] += jnp.dot(h.astype(w2_ref.dtype), w2_ref[...],
                            preferred_element_type=jnp.float32)

    @pl.when(hk == pl.num_programs(1) - 1)
    def _():
        # Dropout (eval mode) == identity.
        o_ref[...] = (acc_ref[...] + b2_ref[...]).astype(o_ref.dtype)


@functools.partial(jax.jit, static_argnames=("orig_e", "out_dtype"))
def _ffn_forward(x, w1p, b1p, w2p, b2p, *, orig_e, out_dtype=None):
    """x: (B, T, E). w1p: (E_pad, H_pad) bf16, b1p: (1, H_pad) f32, etc. (pre-padded)."""
    B, T, _ = x.shape
    M = B * T
    e_pad, h_pad = w1p.shape
    out_dtype = x.dtype if out_dtype is None else out_dtype
    out_bytes = np.dtype(out_dtype).itemsize

    vmem_cap, is_v6, _ = _hw_config()

    block_h = _block_h_for(h_pad)
    m_pad = _round_up(M, 8)                  # rows padded to a sublane multiple only

    # Generation-aware row tile: 1024 on v6e (reach the 918 TF/s ridge), 512 else.
    block_m = _round_up(min(1024 if is_v6 else 512, m_pad), 8)
    # Megacore / dual-TC (v7x): keep >= 2 iterations on the "parallel" row axis.
    if m_pad >= 512 and _cdiv(m_pad, block_m) < 2:
        block_m = _round_up(_cdiv(m_pad, 2), 8)

    def vmem_est(bm):
        return (2 * bm * e_pad * 2                 # x tile (counted double-buffered, conservative)
                + 2 * e_pad * block_h * 2          # W1 slivers (bf16, double-buffered)
                + 2 * block_h * e_pad * 2          # W2 slivers (bf16, double-buffered)
                + 2 * block_h * 4 + e_pad * 4      # b1 (double) + b2 (single)
                + 2 * bm * e_pad * out_bytes       # output tiles
                + bm * e_pad * 4                   # f32 accumulator
                + bm * block_h * 6)                # h intermediate: f32 + bf16 cast copy

    budget = (vmem_cap * 13) // 16               # never oversubscribe physical VMEM (v7x: 64 MiB)
    while block_m > 64 and vmem_est(block_m) * 5 > budget * 4:   # est * 1.25 > budget
        block_m = _round_up(block_m // 2, 8)
    vmem_limit = int(min(max(vmem_est(block_m) * 1.3 + (8 << 20), 32 << 20), budget))

    n_m = _cdiv(m_pad, block_m)                  # ragged last row tile allowed
    n_h = h_pad // block_h
    grid = (n_m, n_h)

    # Per-call activation prep only (weights were padded/cast once at init).
    x2 = _pad2d(x.reshape(M, -1), m_pad, e_pad).astype(jnp.bfloat16)

    cost = pl.CostEstimate(
        flops=4 * (n_m * block_m) * e_pad * h_pad,           # two matmuls
        transcendentals=0,
        bytes_accessed=(m_pad * e_pad * 2                    # x (bf16, read once)
                        + n_m * (e_pad * h_pad * 2 + h_pad * e_pad * 2   # weights re-streamed per row tile
                                 + h_pad * 4 + e_pad * 4)
                        + m_pad * e_pad * out_bytes),        # output writeback
    )

    out = pl.pallas_call(
        _ffn_kernel,
        out_shape=jax.ShapeDtypeStruct((m_pad, e_pad), out_dtype),
        grid_spec=pltpu.PrefetchScalarGridSpec(
            num_scalar_prefetch=0,
            grid=grid,
            in_specs=[
                # x row tile and b2 are invariant along the hidden axis -> single-buffer.
                pl.BlockSpec((block_m, e_pad), lambda i, k: (i, 0),
                             pipeline_mode=pl.Buffered(buffer_count=1)),
                pl.BlockSpec((e_pad, block_h), lambda i, k: (0, k)),    # W1 sliver
                pl.BlockSpec((1, block_h), lambda i, k: (0, k)),        # b1 sliver
                pl.BlockSpec((block_h, e_pad), lambda i, k: (k, 0)),    # W2 sliver
                pl.BlockSpec((1, e_pad), lambda i, k: (0, 0),
                             pipeline_mode=pl.Buffered(buffer_count=1)),
            ],
            out_specs=pl.BlockSpec((block_m, e_pad), lambda i, k: (i, 0)),
            scratch_shapes=[pltpu.VMEM((block_m, e_pad), jnp.float32)],
        ),
        compiler_params=pltpu.CompilerParams(
            dimension_semantics=("parallel", "arbitrary"),
            vmem_limit_bytes=vmem_limit,
        ),
        cost_estimate=cost,
    )(x2, w1p, b1p, w2p, b2p)

    return out[:M, :orig_e].reshape(B, T, orig_e)


class PallasFeedForward:
    """Pallas port of the PyTorch FeedForward block (eval-mode dropout)."""

    def __init__(self, w1, b1, w2, b2, dropout: float = 0.0, out_dtype=None):
        E, H = w1.shape
        _, _, mxu256 = _hw_config()
        self.embed_size = E
        self.dropout = dropout          # TODO(synk): unused (eval-mode identity only)
        self.out_dtype = out_dtype      # e.g. jnp.bfloat16 to halve output writeback
        e_pad = _embed_pad(E, mxu256)
        h_pad = _hidden_pad(H)
        # One-time pad + bf16 cast, hoisted out of the per-call path.
        self.w1 = _pad2d(jnp.asarray(w1), e_pad, h_pad).astype(jnp.bfloat16)
        self.b1 = _pad2d(jnp.asarray(b1).reshape(1, -1), 1, h_pad).astype(jnp.float32)
        self.w2 = _pad2d(jnp.asarray(w2), h_pad, e_pad).astype(jnp.bfloat16)
        self.b2 = _pad2d(jnp.asarray(b2).reshape(1, -1), 1, e_pad).astype(jnp.float32)

    def __call__(self, x):
        return _ffn_forward(x, self.w1, self.b1, self.w2, self.b2,
                            orig_e=self.embed_size, out_dtype=self.out_dtype)


def init_params(key, embed_size):
    """Deterministic params mimicking nn.Linear shapes (stored as (in, out))."""
    hidden = 4 * embed_size
    k1, k2, k3, k4 = jax.random.split(key, 4)
    s1 = 1.0 / jnp.sqrt(embed_size)
    s2 = 1.0 / jnp.sqrt(hidden)
    w1 = jax.random.uniform(k1, (embed_size, hidden), jnp.float32, -s1, s1)
    b1 = jax.random.uniform(k2, (1, hidden), jnp.float32, -s1, s1)
    w2 = jax.random.uniform(k3, (hidden, embed_size), jnp.float32, -s2, s2)
    b2 = jax.random.uniform(k4, (1, embed_size), jnp.float32, -s2, s2)
    return w1, b1, w2, b2


if __name__ == "__main__":
    B, T, E = 2, 8, 32          # batch=2, seq=8, embed=32 -> hidden=128
    key = jax.random.PRNGKey(0)
    kx, kp = jax.random.split(key)
    x = jax.random.normal(kx, (B, T, E), jnp.float32)
    w1, b1, w2, b2 = init_params(kp, E)

    ffn = PallasFeedForward(w1, b1, w2, b2, dropout=0.1)
    out = jax.block_until_ready(ffn(x))

    # pure-JAX f32 reference (kernel runs bf16 matmuls with f32 accumulation).
    ref = jnp.maximum(x.reshape(-1, E) @ w1 + b1, 0.0) @ w2 + b2
    assert out.shape == (B, T, E)
    assert jnp.allclose(out.reshape(-1, E), ref, atol=5e-2, rtol=5e-2), \
        "mismatch vs reference"

    print("KERNEL_OK")
</pallas_src>

<mosaic_0001>
module attributes {stable_mosaic.version = 11 : i64} {
  func.func @_ffn_kernel(%arg0: i32, %arg1: i32, %arg2: memref<16x128xbf16, #tpu.memory_space<vmem>>, %arg3: memref<128x128xbf16, #tpu.memory_space<vmem>>, %arg4: memref<1x128xf32, #tpu.memory_space<vmem>>, %arg5: memref<128x128xbf16, #tpu.memory_space<vmem>>, %arg6: memref<1x128xf32, #tpu.memory_space<vmem>>, %arg7: memref<16x128xf32, #tpu.memory_space<vmem>>, %arg8: memref<16x128xf32, #tpu.memory_space<vmem>>) attributes {dimension_semantics = [#tpu.dimension_semantics<parallel>, #tpu.dimension_semantics<arbitrary>], iteration_bounds = array<i64: 1, 1>, scalar_prefetch = 0 : i64, scratch_operands = 1 : i64, tpu.core_type = #tpu.core_type<tc>, window_params = [{pipeline_mode = #tpu.pipeline_mode<synchronous>, transform_indices = @transform_0, window_bounds = array<i64: 16, 128>}, {transform_indices = @transform_1, window_bounds = array<i64: 128, 128>}, {transform_indices = @transform_2, window_bounds = array<i64: 1, 128>}, {transform_indices = @transform_3, window_bounds = array<i64: 128, 128>}, {pipeline_mode = #tpu.pipeline_mode<synchronous>, transform_indices = @transform_4, window_bounds = array<i64: 1, 128>}, {transform_indices = @transform_5, window_bounds = array<i64: 16, 128>}]} {
    %c0_i32 = arith.constant 0 : i32
    %0 = arith.cmpi eq, %arg1, %c0_i32 : i32
    %1 = arith.extui %0 : i1 to i32
    %c0_i32_0 = arith.constant 0 : i32
    %2 = arith.cmpi ne, %1, %c0_i32_0 : i32
    scf.if %2 {
      %cst_16 = arith.constant 0.000000e+00 : f32
      %20 = vector.broadcast %cst_16 : f32 to vector<16x128xf32>
      %c0_17 = arith.constant 0 : index
      %c0_18 = arith.constant 0 : index
      %21 = vector.load %arg8[%c0_17, %c0_18] : memref<16x128xf32, #tpu.memory_space<vmem>>, vector<16x128xf32>
      tpu.vector_store %arg8[%c0_17, %c0_18], %20 {strides = array<i32>} : memref<16x128xf32, #tpu.memory_space<vmem>>, vector<16x128xf32>,
    } else {
    }
    %c0 = arith.constant 0 : index
    %c0_1 = arith.constant 0 : index
    %3 = vector.load %arg2[%c0, %c0_1] : memref<16x128xbf16, #tpu.memory_space<vmem>>, vector<16x128xbf16>
    %c0_2 = arith.constant 0 : index
    %c0_3 = arith.constant 0 : index
    %4 = vector.load %arg3[%c0_2, %c0_3] : memref<128x128xbf16, #tpu.memory_space<vmem>>, vector<128x128xbf16>
    %cst = arith.constant dense<0.000000e+00> : vector<16x128xf32>
    %5 = tpu.matmul %3, %4, %cst {dimension_numbers = #tpu.dot_dimension_numbers<[1], [0], [0], [1], [0, 0, 1, 1], [], []>} : vector<16x128xbf16>, vector<128x128xbf16>, vector<16x128xf32> -> vector<16x128xf32>
    %c0_4 = arith.constant 0 : index
    %c0_5 = arith.constant 0 : index
    %6 = vector.load %arg4[%c0_4, %c0_5] : memref<1x128xf32, #tpu.memory_space<vmem>>, vector<1x128xf32>
    %7 = vector.broadcast %6 : vector<1x128xf32> to vector<16x128xf32>
    %8 = arith.addf %5, %7 : vector<16x128xf32>
    %cst_6 = arith.constant 0.000000e+00 : f32
    %9 = vector.broadcast %cst_6 : f32 to vector<16x128xf32>
    %10 = arith.maximumf %8, %9 : vector<16x128xf32>
    %c0_7 = arith.constant 0 : index
    %c0_8 = arith.constant 0 : index
    %11 = vector.load %arg8[%c0_7, %c0_8] : memref<16x128xf32, #tpu.memory_space<vmem>>, vector<16x128xf32>
    %12 = arith.truncf %10 : vector<16x128xf32> to vector<16x128xbf16>
    %c0_9 = arith.constant 0 : index
    %c0_10 = arith.constant 0 : index
    %13 = vector.load %arg5[%c0_9, %c0_10] : memref<128x128xbf16, #tpu.memory_space<vmem>>, vector<128x128xbf16>
    %cst_11 = arith.constant dense<0.000000e+00> : vector<16x128xf32>
    %14 = tpu.matmul %12, %13, %cst_11 {dimension_numbers = #tpu.dot_dimension_numbers<[1], [0], [0], [1], [0, 0, 1, 1], [], []>} : vector<16x128xbf16>, vector<128x128xbf16>, vector<16x128xf32> -> vector<16x128xf32>
    %15 = arith.addf %11, %14 : vector<16x128xf32>
    %c0_12 = arith.constant 0 : index
    %c0_13 = arith.constant 0 : index
    %16 = vector.load %arg8[%c0_12, %c0_13] : memref<16x128xf32, #tpu.memory_space<vmem>>, vector<16x128xf32>
    tpu.vector_store %arg8[%c0_12, %c0_13], %15 {strides = array<i32>} : memref<16x128xf32, #tpu.memory_space<vmem>>, vector<16x128xf32>,
    %c0_i32_14 = arith.constant 0 : i32
    %17 = arith.cmpi eq, %arg1, %c0_i32_14 : i32
    %18 = arith.extui %17 : i1 to i32
    %c0_i32_15 = arith.constant 0 : i32
    %19 = arith.cmpi ne, %18, %c0_i32_15 : i32
    scf.if %19 {
      %c0_16 = arith.constant 0 : index
      %c0_17 = arith.constant 0 : index
      %20 = vector.load %arg8[%c0_16, %c0_17] : memref<16x128xf32, #tpu.memory_space<vmem>>, vector<16x128xf32>
      %c0_18 = arith.constant 0 : index
      %c0_19 = arith.constant 0 : index
      %21 = vector.load %arg6[%c0_18, %c0_19] : memref<1x128xf32, #tpu.memory_space<vmem>>, vector<1x128xf32>
      %22 = vector.broadcast %21 : vector<1x128xf32> to vector<16x128xf32>
      %23 = arith.addf %20, %22 : vector<16x128xf32>
      %c0_20 = arith.constant 0 : index
      %c0_21 = arith.constant 0 : index
      %24 = vector.load %arg7[%c0_20, %c0_21] : memref<16x128xf32, #tpu.memory_space<vmem>>, vector<16x128xf32>
      tpu.vector_store %arg7[%c0_20, %c0_21], %23 {strides = array<i32>} : memref<16x128xf32, #tpu.memory_space<vmem>>, vector<16x128xf32>,
    } else {
    }
    return
  }
  func.func @transform_0(%arg0: i32, %arg1: i32) -> (i32, i32) {
    %c0_i32 = arith.constant 0 : i32
    %c0_i32_0 = arith.constant 0 : i32
    return %arg0, %c0_i32 : i32, i32
  }
  func.func @transform_1(%arg0: i32, %arg1: i32) -> (i32, i32) {
    %c0_i32 = arith.constant 0 : i32
    %c0_i32_0 = arith.constant 0 : i32
    return %c0_i32, %arg1 : i32, i32
  }
  func.func @transform_2(%arg0: i32, %arg1: i32) -> (i32, i32) {
    %c0_i32 = arith.constant 0 : i32
    %c0_i32_0 = arith.constant 0 : i32
    return %c0_i32, %arg1 : i32, i32
  }
  func.func @transform_3(%arg0: i32, %arg1: i32) -> (i32, i32) {
    %c0_i32 = arith.constant 0 : i32
    %c0_i32_0 = arith.constant 0 : i32
    return %arg1, %c0_i32 : i32, i32
  }
  func.func @transform_4(%arg0: i32, %arg1: i32) -> (i32, i32) {
    %c0_i32 = arith.constant 0 : i32
    %c0_i32_0 = arith.constant 0 : i32
    %c0_i32_1 = arith.constant 0 : i32
    return %c0_i32, %c0_i32_0 : i32, i32
  }
  func.func @transform_5(%arg0: i32, %arg1: i32) -> (i32, i32) {
    %c0_i32 = arith.constant 0 : i32
    %c0_i32_0 = arith.constant 0 : i32
    return %arg0, %c0_i32 : i32, i32
  }
}

</mosaic_0001>

<llo_original>
// kernel: _ffn_forward.1
$region0: #{_ffn_forward.1}
  #allocation0 [shape = 'u32[]', space=smem, size = 0x4, offset = 0x4, fixed_abs, tag = 'smem constant byte address 0x4 - core index']
  #allocation1 [shape = 'u32[144,128]{1,0:T(1,128)}', space=vmem, size = 0x12000, scoped, tag = 'internal scratch']
  #allocation2 [shape = 'f32[16,128]{1,0:T(8,128)}', space=vmem, size = 0x2000, scoped, tag = 'scratch operand']
  %s0 = inlined_call_operand.vmem [shape: bf16[16,128], index: 0, kind: input, shape index: {}]
  %s1 = inlined_call_operand.hbm [shape: bf16[128,128], index: 1, kind: input, shape index: {}]
  %s2 = inlined_call_operand.vmem [shape: f32[1,128], index: 2, kind: input, shape index: {}]
  %s3 = inlined_call_operand.hbm [shape: bf16[128,128], index: 3, kind: input, shape index: {}]
  %s4 = inlined_call_operand.vmem [shape: f32[1,128], index: 4, kind: input, shape index: {}]
  %s5 = inlined_call_operand.vmem [shape: f32[16,128], index: 5, kind: output, shape index: {}]
  %s6 = sld [smem:[#allocation0]]
  $region46: #{_ffn_forward.1} parent=0
    _
  %s8 = ssub.s32 1, %s6
  %s9 = scalar_select 0, %s8, %s6
  $region1: #{_ffn_forward.1} parent=0
    #allocation3 [shape = 'u8[32768]{0}', space=vmem, size = 0x8000, scoped, tag = 'input window, operand 1, single buffered']
    #allocation4 [shape = 's32[1]{0}', space=sflag, size = 0x4, scoped, tag = 'scoped memory for _ffn_forward.1']
    #allocation5 [shape = 'u8[32768]{0}', space=vmem, size = 0x8000, scoped, tag = 'input window, operand 3, single buffered']
    #allocation6 [shape = 's32[1]{0}', space=sflag, size = 0x4, scoped, tag = 'scoped memory for _ffn_forward.1']
    %10 = vsyncpa [#allocation4], 0
    %11 = vsyncpa [#allocation6], 0
    // Predicated region
    $region2: #{_ffn_forward.1} parent=1 // pred_check
      _
    $region3: #{_ffn_forward.1} parent=1 // pred_check_branch
      %13 = sbr.rel (0) target = $region5
    $region4: #{_ffn_forward.1} parent=1 // pred_region
      _
    $region5: #{_ffn_forward.1} parent=1 // pred_fallthru
      _
    // Predicated region
    $region6: #{_ffn_forward.1} parent=1 // pred_check
      _
    $region7: #{_ffn_forward.1} parent=1 // pred_check_branch
      %15 = sbr.rel (0) target = $region9
    $region8: #{_ffn_forward.1} parent=1 // pred_region
      %s17 = ssub.s32 1024, 1024
      %18 = vsyncadd [#allocation4], %s17
      %s19 = sshll.u32 [#allocation3], 4
      %s20 = int_to_ptr.vmem [resolvable:$true] %s19
      %25 = dma.hbm_to_vmem [thread:$0]  %s1, 1024, %s20, [#allocation4], 64, 64, 4
    $region9: #{_ffn_forward.1} parent=1 // pred_fallthru
      _
    // Predicated region
    $region10: #{_ffn_forward.1} parent=1 // pred_check
      _
    $region11: #{_ffn_forward.1} parent=1 // pred_check_branch
      %27 = sbr.rel (0) target = $region13
    $region12: #{_ffn_forward.1} parent=1 // pred_region
      _
    $region13: #{_ffn_forward.1} parent=1 // pred_fallthru
      _
    // Predicated region
    $region14: #{_ffn_forward.1} parent=1 // pred_check
      _
    $region15: #{_ffn_forward.1} parent=1 // pred_check_branch
      %29 = sbr.rel (0) target = $region17
    $region16: #{_ffn_forward.1} parent=1 // pred_region
      %s31 = ssub.s32 1024, 1024
      %32 = vsyncadd [#allocation6], %s31
      %s33 = sshll.u32 [#allocation5], 4
      %s34 = int_to_ptr.vmem [resolvable:$true] %s33
      %39 = dma.hbm_to_vmem [thread:$0]  %s3, 1024, %s34, [#allocation6], 64, 64, 4
    $region17: #{_ffn_forward.1} parent=1 // pred_fallthru
      _
    // Predicated region
    $region18: #{_ffn_forward.1} parent=1 // pred_check
      _
    $region19: #{_ffn_forward.1} parent=1 // pred_check_branch
      %41 = sbr.rel (0) target = $region21
    $region20: #{_ffn_forward.1} parent=1 // pred_region
      _
    $region21: #{_ffn_forward.1} parent=1 // pred_fallthru
      _
    // Predicated region
    $region22: #{_ffn_forward.1} parent=1 // pred_check
      _
    $region23: #{_ffn_forward.1} parent=1 // pred_check_branch
      %43 = sbr.rel (0) target = $region25
    $region24: #{_ffn_forward.1} parent=1 // pred_region
      %44 = dma.done [#allocation4], 1024
    $region25: #{_ffn_forward.1} parent=1 // pred_fallthru
      _
    // Predicated region
    $region26: #{_ffn_forward.1} parent=1 // pred_check
      _
    $region27: #{_ffn_forward.1} parent=1 // pred_check_branch
      %46 = sbr.rel (0) target = $region29
    $region28: #{_ffn_forward.1} parent=1 // pred_region
      %47 = dma.done [#allocation6], 1024
    $region29: #{_ffn_forward.1} parent=1 // pred_fallthru
      _
    %p49 = scmp.eq.s32.totalorder 0, 0
    // Predicated region
    $region30: #{_ffn_forward.1} parent=1 // pred_check
      %p50 = pneg %p49
    $region31: #{_ffn_forward.1} parent=1 // pred_check_branch
      %52 = sbr.rel (%p50) target = $region33
    $region32: #{_ffn_forward.1} parent=1 // pred_region
      %53 = vst [vmem:[#allocation2] sm:$0xff] 0.0
      %54 = vst [vmem:[#allocation2 + $0x8] sm:$0xff] 0.0
    $region33: #{_ffn_forward.1} parent=1 // pred_fallthru
      _
    %v55 = vld [vmem:[%s0] sm:$0xf]
    %v56 = vld [vmem:[%s0 + $0x4] sm:$0xf]
    %v57 = vld [vmem:[#allocation3] sm:$0xf]
    %v58 = vld [vmem:[#allocation3 + $0x4] sm:$0xf]
    %v59 = vld [vmem:[#allocation3 + $0x8] sm:$0xf]
    %v60 = vld [vmem:[#allocation3 + $0xc] sm:$0xf]
    %v61 = vld [vmem:[#allocation3 + $0x10] sm:$0xf]
    %v62 = vld [vmem:[#allocation3 + $0x14] sm:$0xf]
    %v63 = vld [vmem:[#allocation3 + $0x18] sm:$0xf]
    %v64 = vld [vmem:[#allocation3 + $0x1c] sm:$0xf]
    %v65 = vld [vmem:[#allocation3 + $0x20] sm:$0xf]
    %v66 = vld [vmem:[#allocation3 + $0x24] sm:$0xf]
    %v67 = vld [vmem:[#allocation3 + $0x28] sm:$0xf]
    %v68 = vld [vmem:[#allocation3 + $0x2c] sm:$0xf]
    %v69 = vld [vmem:[#allocation3 + $0x30] sm:$0xf]
    %v70 = vld [vmem:[#allocation3 + $0x34] sm:$0xf]
    %v71 = vld [vmem:[#allocation3 + $0x38] sm:$0xf]
    %v72 = vld [vmem:[#allocation3 + $0x3c] sm:$0xf]
    %v73 = vld [vmem:[%s2] sm:$0x1]
    %v75 = vlaneseq
    %v76 = vshrl.u32 %v75, 7
    %v77 = vsub.s32 0, %v76
    %v78 = vrot.slane %v73, %v77
    %v82 = vunpack.c.l.b16 %v55
    %v83 = vunpack.c.l.b16 %v56
    %v84 = vpack.c.b16 %v83, %v82
    %v102 = vunpack.c.l.b16 %v57
    %v103 = vunpack.c.l.b16 %v58
    %v104 = vunpack.c.l.b16 %v59
    %v105 = vunpack.c.l.b16 %v60
    %v106 = vunpack.c.l.b16 %v61
    %v107 = vunpack.c.l.b16 %v62
    %v108 = vunpack.c.l.b16 %v63
    %v109 = vunpack.c.l.b16 %v64
    %v110 = vunpack.c.l.b16 %v65
    %v111 = vunpack.c.l.b16 %v66
    %v112 = vunpack.c.l.b16 %v67
    %v113 = vunpack.c.l.b16 %v68
    %v114 = vunpack.c.l.b16 %v69
    %v115 = vunpack.c.l.b16 %v70
    %v116 = vunpack.c.l.b16 %v71
    %v117 = vunpack.c.l.b16 %v72
    %v118 = vpack.c.b16 %v103, %v102
    %v119 = vpack.c.b16 %v105, %v104
    %v120 = vpack.c.b16 %v107, %v106
    %v121 = vpack.c.b16 %v109, %v108
    %v122 = vpack.c.b16 %v111, %v110
    %v123 = vpack.c.b16 %v113, %v112
    %v124 = vpack.c.b16 %v115, %v114
    %v125 = vpack.c.b16 %v117, %v116
    %134 = vmatprep.subr.bf16.mxu0 0
    %135 = vmatpush1.bf16.msra.mxu0 %v118
    %136 = vmatprep.subr.bf16.mxu0 0
    %137 = vmatpush1.bf16.msra.mxu0 %v119
    %138 = vmatprep.subr.bf16.mxu0 0
    %139 = vmatpush1.bf16.msra.mxu0 %v120
    %140 = vmatprep.subr.bf16.mxu0 0
    %141 = vmatpush1.bf16.msra.mxu0 %v121
    %142 = vmatprep.subr.bf16.mxu0 0
    %143 = vmatpush1.bf16.msra.mxu0 %v122
    %144 = vmatprep.subr.bf16.mxu0 0
    %145 = vmatpush1.bf16.msra.mxu0 %v123
    %146 = vmatprep.subr.bf16.mxu0 0
    %147 = vmatpush1.bf16.msra.mxu0 %v124
    %148 = vmatprep.subr.bf16.mxu0 0
    %149 = vmatpush1.bf16.msra.mxu0 %v125
    %150 = vmatprep.subr.bf16.mxu0 0
    %151 = vmatpush1.bf16.msra.mxu0 0
    %152 = vmatprep.subr.bf16.mxu0 0
    %153 = vmatpush1.bf16.msra.mxu0 0
    %154 = vmatprep.subr.bf16.mxu0 0
    %155 = vmatpush1.bf16.msra.mxu0 0
    %156 = vmatprep.subr.bf16.mxu0 0
    %157 = vmatpush1.bf16.msra.mxu0 0
    %158 = vmatprep.subr.bf16.mxu0 0
    %159 = vmatpush1.bf16.msra.mxu0 0
    %160 = vmatprep.subr.bf16.mxu0 0
    %161 = vmatpush1.bf16.msra.mxu0 0
    %162 = vmatprep.subr.bf16.mxu0 0
    %163 = vmatpush1.bf16.msra.mxu0 0
    %164 = vmatprep.subr.bf16.mxu0 0
    %165 = vmatpush1.bf16.msra.mxu0 0
    %166 = vmatprep.mubr.bf16.mxu0 0
    %167 = vmatmul.mubr.bf16.gmra.mrb[0].mxu0 %v84
    %v168 = vpop.f32.mrb[0].mxu0
    %v169 = vadd.f32 %v78, %v168
    %v170 = vpop.f32.mrb[0].mxu0
    %v171 = vpop.f32.mrb[0].mxu0
    %v172 = vadd.f32 %v78, %v171
    %v173 = vpop.f32.mrb[0].mxu0
    %174 = vdwg.mxu0
    %v175 = vmax.f32 %v169, 0.0
    %v176 = vmax.f32 %v172, 0.0
    %v177 = vld [vmem:[#allocation2] sm:$0xff]
    %v178 = vld [vmem:[#allocation2 + $0x8] sm:$0xff]
    %v179 = vpack.c.bf16 %v176, %v175
    %v180 = vld [vmem:[#allocation5] sm:$0xf]
    %v181 = vld [vmem:[#allocation5 + $0x4] sm:$0xf]
    %v182 = vld [vmem:[#allocation5 + $0x8] sm:$0xf]
    %v183 = vld [vmem:[#allocation5 + $0xc] sm:$0xf]
    %v184 = vld [vmem:[#allocation5 + $0x10] sm:$0xf]
    %v185 = vld [vmem:[#allocation5 + $0x14] sm:$0xf]
    %v186 = vld [vmem:[#allocation5 + $0x18] sm:$0xf]
    %v187 = vld [vmem:[#allocation5 + $0x1c] sm:$0xf]
    %v188 = vld [vmem:[#allocation5 + $0x20] sm:$0xf]
    %v189 = vld [vmem:[#allocation5 + $0x24] sm:$0xf]
    %v190 = vld [vmem:[#allocation5 + $0x28] sm:$0xf]
    %v191 = vld [vmem:[#allocation5 + $0x2c] sm:$0xf]
    %v192 = vld [vmem:[#allocation5 + $0x30] sm:$0xf]
    %v193 = vld [vmem:[#allocation5 + $0x34] sm:$0xf]
    %v194 = vld [vmem:[#allocation5 + $0x38] sm:$0xf]
    %v195 = vld [vmem:[#allocation5 + $0x3c] sm:$0xf]
    %v212 = vunpack.c.l.b16 %v180
    %v213 = vunpack.c.l.b16 %v181
    %v214 = vunpack.c.l.b16 %v182
    %v215 = vunpack.c.l.b16 %v183
    %v216 = vunpack.c.l.b16 %v184
    %v217 = vunpack.c.l.b16 %v185
    %v218 = vunpack.c.l.b16 %v186
    %v219 = vunpack.c.l.b16 %v187
    %v220 = vunpack.c.l.b16 %v188
    %v221 = vunpack.c.l.b16 %v189
    %v222 = vunpack.c.l.b16 %v190
    %v223 = vunpack.c.l.b16 %v191
    %v224 = vunpack.c.l.b16 %v192
    %v225 = vunpack.c.l.b16 %v193
    %v226 = vunpack.c.l.b16 %v194
    %v227 = vunpack.c.l.b16 %v195
    %v228 = vpack.c.b16 %v213, %v212
    %v229 = vpack.c.b16 %v215, %v214
    %v230 = vpack.c.b16 %v217, %v216
    %v231 = vpack.c.b16 %v219, %v218
    %v232 = vpack.c.b16 %v221, %v220
    %v233 = vpack.c.b16 %v223, %v222
    %v234 = vpack.c.b16 %v225, %v224
    %v235 = vpack.c.b16 %v227, %v226
    %244 = vmatprep.subr.bf16.mxu0 0
    %245 = vmatpush1.bf16.msra.mxu0 %v228
    %246 = vmatprep.subr.bf16.mxu0 0
    %247 = vmatpush1.bf16.msra.mxu0 %v229
    %248 = vmatprep.subr.bf16.mxu0 0
    %249 = vmatpush1.bf16.msra.mxu0 %v230
    %250 = vmatprep.subr.bf16.mxu0 0
    %251 = vmatpush1.bf16.msra.mxu0 %v231
    %252 = vmatprep.subr.bf16.mxu0 0
    %253 = vmatpush1.bf16.msra.mxu0 %v232
    %254 = vmatprep.subr.bf16.mxu0 0
    %255 = vmatpush1.bf16.msra.mxu0 %v233
    %256 = vmatprep.subr.bf16.mxu0 0
    %257 = vmatpush1.bf16.msra.mxu0 %v234
    %258 = vmatprep.subr.bf16.mxu0 0
    %259 = vmatpush1.bf16.msra.mxu0 %v235
    %260 = vmatprep.subr.bf16.mxu0 0
    %261 = vmatpush1.bf16.msra.mxu0 0
    %262 = vmatprep.subr.bf16.mxu0 0
    %263 = vmatpush1.bf16.msra.mxu0 0
    %264 = vmatprep.subr.bf16.mxu0 0
    %265 = vmatpush1.bf16.msra.mxu0 0
    %266 = vmatprep.subr.bf16.mxu0 0
    %267 = vmatpush1.bf16.msra.mxu0 0
    %268 = vmatprep.subr.bf16.mxu0 0
    %269 = vmatpush1.bf16.msra.mxu0 0
    %270 = vmatprep.subr.bf16.mxu0 0
    %271 = vmatpush1.bf16.msra.mxu0 0
    %272 = vmatprep.subr.bf16.mxu0 0
    %273 = vmatpush1.bf16.msra.mxu0 0
    %274 = vmatprep.subr.bf16.mxu0 0
    %275 = vmatpush1.bf16.msra.mxu0 0
    %276 = vmatprep.mubr.bf16.mxu0 0
    %277 = vmatmul.mubr.bf16.gmra.mrb[0].mxu0 %v179
    %v278 = vpop.f32.mrb[0].mxu0
    %v279 = vadd.f32 0.0, %v278
    %v280 = vpop.f32.mrb[0].mxu0
    %v281 = vpop.f32.mrb[0].mxu0
    %v282 = vadd.f32 0.0, %v281
    %v283 = vpop.f32.mrb[0].mxu0
    %284 = vdwg.mxu0
    %v285 = vadd.f32 %v177, %v279
    %v286 = vadd.f32 %v178, %v282
    %287 = vst [vmem:[#allocation2] sm:$0xff] %v285
    %288 = vst [vmem:[#allocation2 + $0x8] sm:$0xff] %v286
    // Predicated region
    $region34: #{_ffn_forward.1} parent=1 // pred_check
      %p289 = pneg %p49
    $region35: #{_ffn_forward.1} parent=1 // pred_check_branch
      %291 = sbr.rel (%p289) target = $region37
    $region36: #{_ffn_forward.1} parent=1 // pred_region
      %v292 = vld [vmem:[#allocation2] sm:$0xff]
      %v293 = vld [vmem:[#allocation2 + $0x8] sm:$0xff]
      %v294 = vld [vmem:[%s4] sm:$0x1]
      %v296 = vlaneseq
      %v297 = vshrl.u32 %v296, 7
      %v298 = vsub.s32 0, %v297
      %v299 = vrot.slane %v294, %v298
      %v301 = vadd.f32 %v292, %v299
      %v302 = vadd.f32 %v293, %v299
      %303 = vst [vmem:[%s5] sm:$0xff] %v301
      %304 = vst [vmem:[%s5 + $0x8] sm:$0xff] %v302
    $region37: #{_ffn_forward.1} parent=1 // pred_fallthru
      _
    // Predicated region
    $region38: #{_ffn_forward.1} parent=1 // pred_check
      _
    $region39: #{_ffn_forward.1} parent=1 // pred_check_branch
      %306 = sbr.rel (0) target = $region41
    $region40: #{_ffn_forward.1} parent=1 // pred_region
      _
    $region41: #{_ffn_forward.1} parent=1 // pred_fallthru
      _
    // Predicated region
    $region42: #{_ffn_forward.1} parent=1 // pred_check
      _
    $region43: #{_ffn_forward.1} parent=1 // pred_check_branch
      %308 = sbr.rel (0) target = $region45
    $region44: #{_ffn_forward.1} parent=1 // pred_region
      _
    $region45: #{_ffn_forward.1} parent=1 // pred_fallthru
      _
    %309 = vsyncpa [#allocation4], 1
    %310 = vsyncpa [#allocation6], 1

</llo_original>
